<compile_context>
chip_gen: v7x
topology: tpu7x:2x2x1
jax: 0.10.0
libtpu: 0.0.40
codegen_flags: <defaults>
</compile_context>

<pallas_src>
import jax
import jax.numpy as jnp
from jax.experimental import pallas as pl
from jax.experimental.pallas import tpu as pltpu

NEG_SLOPE = 0.2       # DGL GATConv default negative_slope
MASK_VAL = -1e30      # finite "minus infinity" for masked logits


def _round_up(v, m):
    return (v + m - 1) // m * m


# --------------------------------------------------------------------------
# Stage 1: projection (computed ONCE, not per destination block).
#   feat = X @ W            (node_tile, Fp)
#   el   = sum(feat*attn_l) (node_tile, 1)   -- VPU, matches reference exactly
#   er   = sum(feat*attn_r) (node_tile, 1)
# --------------------------------------------------------------------------
def proj_kernel(x_ref, w_ref, p_ref, feat_ref, el_ref, er_ref):
    feat = jnp.dot(x_ref[...], w_ref[...], preferred_element_type=jnp.float32)
    feat_ref[...] = feat
    al = p_ref[0:1, :]                                   # (1, Fp)
    ar = p_ref[1:2, :]                                   # (1, Fp)
    el_ref[...] = jnp.sum(feat * al, axis=-1, keepdims=True)
    er_ref[...] = jnp.sum(feat * ar, axis=-1, keepdims=True)


# --------------------------------------------------------------------------
# Stage 2: GAT attention + aggregation with online softmax over src blocks.
# grid = (dst_blocks, src_blocks); src (reduction) axis last, "arbitrary".
# --------------------------------------------------------------------------
def gat_kernel(feat_ref, el_ref, er_ref, adj_ref, p_ref, out_ref,
               m_sc, l_sc, acc_sc):
    s = pl.program_id(1)

    @pl.when(s == 0)
    def _():
        m_sc[...] = jnp.full(m_sc.shape, MASK_VAL, m_sc.dtype)
        l_sc[...] = jnp.zeros(l_sc.shape, l_sc.dtype)
        acc_sc[...] = jnp.zeros(acc_sc.shape, acc_sc.dtype)

    adj = adj_ref[...].astype(jnp.float32)               # (TD, TS), 0/1

    # Logits in (dst, src) orientation: e[v, u] = er[v] + el[u].
    e = er_ref[...] + el_ref[...]                         # (TD,1)+(1,TS)
    e = jnp.maximum(e, NEG_SLOPE * e)                     # LeakyReLU (1 VALU op)
    e = jnp.where(adj > 0, e, MASK_VAL)                   # mask BEFORE the max

    # Online (streaming) softmax update.
    m_prev = m_sc[...]
    m_new = jnp.maximum(m_prev, jnp.max(e, axis=-1, keepdims=True))   # (TD,1)
    corr = jnp.exp(m_prev - m_new)                        # rescale factor
    # exp(e-m)=1 on fully-masked rows (m == MASK_VAL) -> zeroed by *adj.
    p = jnp.exp(e - m_new) * adj                          # (TD, TS)
    l_sc[...] = corr * l_sc[...] + jnp.sum(p, axis=-1, keepdims=True)
    acc_sc[...] = corr * acc_sc[...] + jnp.dot(
        p, feat_ref[...], preferred_element_type=jnp.float32)          # MXU
    m_sc[...] = m_new

    @pl.when(s == pl.num_programs(1) - 1)
    def _():
        bias = p_ref[2:3, :]                              # (1, Fp)
        # Exact normalization; denom==0 (zero in-degree / padded node) -> bias.
        denom = jnp.maximum(l_sc[...], 1e-20)
        out_ref[...] = (acc_sc[...] / denom + bias).astype(out_ref.dtype)


def gat_forward(x, w, attn_l, attn_r, adj, bias):
    """adj[u, v] = 1 iff edge u -> v exists (source rows, dest columns)."""
    n, fin = x.shape
    fout = w.shape[1]
    f_pad = _round_up(fout, 128)                          # lane-dense output

    # Tile selection. v7x (64 MiB VMEM): dst 128 / src 512. On v6e/v5e
    # (128 MiB) dst_tile=256, src_tile>=1024 halves the grid-step overhead.
    if n >= 512:
        dst_tile, src_tile = 128, 512
    elif n >= 128:
        dst_tile, src_tile = 128, 128
    else:
        dst_tile = src_tile = _round_up(n, 8)
    n_pad = _round_up(n, max(dst_tile, src_tile))

    # Zero padding is inert: padded feature lanes are zero, padded nodes have
    # no edges and their rows are sliced off at the end.
    xp = jnp.pad(x.astype(jnp.float32), ((0, n_pad - n), (0, 0)))
    wp = jnp.pad(w.astype(jnp.float32), ((0, 0), (0, f_pad - fout)))

    # Merge tiny (1, Fout) parameters into one (8, Fp) block -> single DMA.
    params = jnp.zeros((8, f_pad), jnp.float32)
    params = params.at[0, :fout].set(attn_l.reshape(-1))
    params = params.at[1, :fout].set(attn_r.reshape(-1))
    params = params.at[2, :fout].set(bias.reshape(-1))

    # Adjacency in (dst, src) orientation, streamed as bf16 (exact for 0/1).
    adj_t = jnp.zeros((n_pad, n_pad), jnp.bfloat16)
    adj_t = adj_t.at[:n, :n].set(adj.T.astype(jnp.bfloat16))

    # ---- Stage 1: projection (once) ----
    proj_tile = dst_tile
    feat, el_col, er_col = pl.pallas_call(
        proj_kernel,
        out_shape=(jax.ShapeDtypeStruct((n_pad, f_pad), jnp.float32),
                   jax.ShapeDtypeStruct((n_pad, 1), jnp.float32),
                   jax.ShapeDtypeStruct((n_pad, 1), jnp.float32)),
        grid=(n_pad // proj_tile,),
        in_specs=[
            pl.BlockSpec((proj_tile, fin), lambda i: (i, 0)),
            pl.BlockSpec((fin, f_pad), lambda i: (0, 0)),
            pl.BlockSpec((8, f_pad), lambda i: (0, 0)),
        ],
        out_specs=(pl.BlockSpec((proj_tile, f_pad), lambda i: (i, 0)),
                   pl.BlockSpec((proj_tile, 1), lambda i: (i, 0)),
                   pl.BlockSpec((proj_tile, 1), lambda i: (i, 0))),
        compiler_params=pltpu.CompilerParams(
            dimension_semantics=("parallel",)),
    )(xp, wp, params)

    # Layout plumbing (wrapper-side): el as a (1, N) row so the kernel gets a
    # ready-to-broadcast lane vector with no in-kernel transpose.
    el_row = el_col.reshape(1, n_pad)

    # ---- Stage 2: attention + aggregation ----
    out = pl.pallas_call(
        gat_kernel,
        out_shape=jax.ShapeDtypeStruct((n_pad, f_pad), jnp.float32),
        grid=(n_pad // dst_tile, n_pad // src_tile),
        in_specs=[
            pl.BlockSpec((src_tile, f_pad), lambda d, s: (s, 0)),   # feat, src blk
            pl.BlockSpec((1, src_tile), lambda d, s: (0, s)),       # el row blk
            pl.BlockSpec((dst_tile, 1), lambda d, s: (d, 0)),       # er col blk
            pl.BlockSpec((dst_tile, src_tile), lambda d, s: (d, s)),  # adjacency
            pl.BlockSpec((8, f_pad), lambda d, s: (0, 0)),          # params
        ],
        out_specs=pl.BlockSpec((dst_tile, f_pad), lambda d, s: (d, 0)),
        scratch_shapes=[
            pltpu.VMEM((dst_tile, 1), jnp.float32),      # running max m
            pltpu.VMEM((dst_tile, 1), jnp.float32),      # running denom l
            pltpu.VMEM((dst_tile, f_pad), jnp.float32),  # running numerator
        ],
        compiler_params=pltpu.CompilerParams(
            dimension_semantics=("parallel", "arbitrary")),
    )(feat, el_row, er_col, adj_t, params)

    return out[:n, :fout]


def _reference(x, w, attn_l, attn_r, adj, bias):
    feat = x @ w
    el = (feat * attn_l).sum(-1, keepdims=True)
    er = (feat * attn_r).sum(-1, keepdims=True)
    e = el + er.T                                  # e[u, v] for edge u -> v
    e = jnp.where(e > 0, e, NEG_SLOPE * e)
    e = jnp.where(adj > 0, e, -jnp.inf)
    alpha = jax.nn.softmax(e, axis=0)
    alpha = jnp.where(adj > 0, alpha, 0.0)
    return alpha.T @ feat + bias


if __name__ == "__main__":
    # Small, deterministic problem consistent with GATModel(in_feats, out_feats).
    N = 8
    IN_FEATS = 16
    OUT_FEATS = 32

    key = jax.random.PRNGKey(0)
    kx, kw, kl, kr = jax.random.split(key, 4)

    x = jax.random.normal(kx, (N, IN_FEATS), dtype=jnp.float32)
    w = jax.random.normal(kw, (IN_FEATS, OUT_FEATS), dtype=jnp.float32) * (
        (2.0 / (IN_FEATS + OUT_FEATS)) ** 0.5)
    attn_l = jax.random.normal(kl, (1, OUT_FEATS), dtype=jnp.float32) * (
        (2.0 / (1 + OUT_FEATS)) ** 0.5)
    attn_r = jax.random.normal(kr, (1, OUT_FEATS), dtype=jnp.float32) * (
        (2.0 / (1 + OUT_FEATS)) ** 0.5)
    bias = jnp.zeros((1, OUT_FEATS), dtype=jnp.float32)

    # Deterministic graph: ring (i -> (i+1) % N) plus self-loops so every node
    # has nonzero in-degree (mirrors typical DGL usage with add_self_loop).
    adj = jnp.zeros((N, N), dtype=jnp.float32)
    src = jnp.arange(N)
    dst = (src + 1) % N
    adj = adj.at[src, dst].set(1.0)
    adj = adj.at[src, src].set(1.0)

    out = gat_forward(x, w, attn_l, attn_r, adj, bias)
    out = jax.block_until_ready(out)

    ref = _reference(x, w, attn_l, attn_r, adj, bias)
    assert out.shape == (N, OUT_FEATS)
    # Tolerance accounts for TPU default matmul precision (bf16 operand
    # rounding) hitting the kernel's unnormalized p@feat and the reference's
    # normalized alpha@feat slightly differently; the algorithm itself is
    # exact f32 (no approximate reciprocal).
    err = float(jnp.max(jnp.abs(out - ref)))
    assert jnp.allclose(out, ref, atol=5e-3, rtol=5e-3), err

    print("KERNEL_OK")
</pallas_src>

<mosaic_0001>
module attributes {stable_mosaic.version = 11 : i64} {
  func.func @proj_kernel(%arg0: i32, %arg1: memref<8x16xf32, #tpu.memory_space<vmem>>, %arg2: memref<16x128xf32, #tpu.memory_space<vmem>>, %arg3: memref<8x128xf32, #tpu.memory_space<vmem>>, %arg4: memref<8x128xf32, #tpu.memory_space<vmem>>, %arg5: memref<8x1xf32, #tpu.memory_space<vmem>>, %arg6: memref<8x1xf32, #tpu.memory_space<vmem>>) attributes {dimension_semantics = [#tpu.dimension_semantics<parallel>], iteration_bounds = array<i64: 1>, scalar_prefetch = 0 : i64, scratch_operands = 0 : i64, tpu.core_type = #tpu.core_type<tc>, window_params = [{transform_indices = @transform_0, window_bounds = array<i64: 8, 16>}, {pipeline_mode = #tpu.pipeline_mode<synchronous>, transform_indices = @transform_1, window_bounds = array<i64: 16, 128>}, {pipeline_mode = #tpu.pipeline_mode<synchronous>, transform_indices = @transform_2, window_bounds = array<i64: 8, 128>}, {transform_indices = @transform_3, window_bounds = array<i64: 8, 128>}, {transform_indices = @transform_4, window_bounds = array<i64: 8, 1>}, {transform_indices = @transform_5, window_bounds = array<i64: 8, 1>}]} {
    %c0 = arith.constant 0 : index
    %c0_0 = arith.constant 0 : index
    %0 = vector.load %arg1[%c0, %c0_0] : memref<8x16xf32, #tpu.memory_space<vmem>>, vector<8x16xf32>
    %c0_1 = arith.constant 0 : index
    %c0_2 = arith.constant 0 : index
    %1 = vector.load %arg2[%c0_1, %c0_2] : memref<16x128xf32, #tpu.memory_space<vmem>>, vector<16x128xf32>
    %cst = arith.constant dense<0.000000e+00> : vector<8x128xf32>
    %2 = tpu.matmul %0, %1, %cst {dimension_numbers = #tpu.dot_dimension_numbers<[1], [0], [0], [1], [0, 0, 1, 1], [], []>} : vector<8x16xf32>, vector<16x128xf32>, vector<8x128xf32> -> vector<8x128xf32>
    %c0_3 = arith.constant 0 : index
    %c0_4 = arith.constant 0 : index
    %3 = vector.load %arg4[%c0_3, %c0_4] : memref<8x128xf32, #tpu.memory_space<vmem>>, vector<8x128xf32>
    tpu.vector_store %arg4[%c0_3, %c0_4], %2 {strides = array<i32>} : memref<8x128xf32, #tpu.memory_space<vmem>>, vector<8x128xf32>,
    %c0_5 = arith.constant 0 : index
    %c0_6 = arith.constant 0 : index
    %4 = vector.load %arg3[%c0_5, %c0_6] : memref<8x128xf32, #tpu.memory_space<vmem>>, vector<1x128xf32>
    %c1 = arith.constant 1 : index
    %c0_7 = arith.constant 0 : index
    %5 = vector.load %arg3[%c1, %c0_7] : memref<8x128xf32, #tpu.memory_space<vmem>>, vector<1x128xf32>
    %6 = vector.broadcast %4 : vector<1x128xf32> to vector<8x128xf32>
    %7 = arith.mulf %2, %6 : vector<8x128xf32>
    %cst_8 = arith.constant dense<0.000000e+00> : vector<8xf32>
    %8 = vector.multi_reduction <add>, %7, %cst_8 [1] : vector<8x128xf32> to vector<8xf32>
    %9 = vector.shape_cast %8 : vector<8xf32> to vector<8x1xf32>
    %c0_9 = arith.constant 0 : index
    %c0_10 = arith.constant 0 : index
    %10 = vector.load %arg5[%c0_9, %c0_10] : memref<8x1xf32, #tpu.memory_space<vmem>>, vector<8x1xf32>
    tpu.vector_store %arg5[%c0_9, %c0_10], %9 {strides = array<i32>} : memref<8x1xf32, #tpu.memory_space<vmem>>, vector<8x1xf32>,
    %11 = vector.broadcast %5 : vector<1x128xf32> to vector<8x128xf32>
    %12 = arith.mulf %2, %11 : vector<8x128xf32>
    %cst_11 = arith.constant dense<0.000000e+00> : vector<8xf32>
    %13 = vector.multi_reduction <add>, %12, %cst_11 [1] : vector<8x128xf32> to vector<8xf32>
    %14 = vector.shape_cast %13 : vector<8xf32> to vector<8x1xf32>
    %c0_12 = arith.constant 0 : index
    %c0_13 = arith.constant 0 : index
    %15 = vector.load %arg6[%c0_12, %c0_13] : memref<8x1xf32, #tpu.memory_space<vmem>>, vector<8x1xf32>
    tpu.vector_store %arg6[%c0_12, %c0_13], %14 {strides = array<i32>} : memref<8x1xf32, #tpu.memory_space<vmem>>, vector<8x1xf32>,
    return
  }
  func.func @transform_0(%arg0: i32) -> (i32, i32) {
    %c0_i32 = arith.constant 0 : i32
    %c0_i32_0 = arith.constant 0 : i32
    return %arg0, %c0_i32 : i32, i32
  }
  func.func @transform_1(%arg0: i32) -> (i32, i32) {
    %c0_i32 = arith.constant 0 : i32
    %c0_i32_0 = arith.constant 0 : i32
    %c0_i32_1 = arith.constant 0 : i32
    return %c0_i32, %c0_i32_0 : i32, i32
  }
  func.func @transform_2(%arg0: i32) -> (i32, i32) {
    %c0_i32 = arith.constant 0 : i32
    %c0_i32_0 = arith.constant 0 : i32
    %c0_i32_1 = arith.constant 0 : i32
    return %c0_i32, %c0_i32_0 : i32, i32
  }
  func.func @transform_3(%arg0: i32) -> (i32, i32) {
    %c0_i32 = arith.constant 0 : i32
    %c0_i32_0 = arith.constant 0 : i32
    return %arg0, %c0_i32 : i32, i32
  }
  func.func @transform_4(%arg0: i32) -> (i32, i32) {
    %c0_i32 = arith.constant 0 : i32
    %c0_i32_0 = arith.constant 0 : i32
    return %arg0, %c0_i32 : i32, i32
  }
  func.func @transform_5(%arg0: i32) -> (i32, i32) {
    %c0_i32 = arith.constant 0 : i32
    %c0_i32_0 = arith.constant 0 : i32
    return %arg0, %c0_i32 : i32, i32
  }
}

</mosaic_0001>

<llo_original>
// kernel: tpu_custom_call.1
$region0: #{tpu_custom_call.1}
  #allocation0 [shape = 'u32[]', space=smem, size = 0x4, offset = 0x4, fixed_abs, tag = 'smem constant byte address 0x4 - core index']
  #allocation1 [shape = 'u32[144,128]{1,0:T(1,128)}', space=vmem, size = 0x12000, scoped, tag = 'internal scratch']
  %s0 = inlined_call_operand.hbm [shape: f32[8,16], index: 0, kind: input, shape index: {}]
  %s1 = inlined_call_operand.hbm [shape: f32[16,128], index: 1, kind: input, shape index: {}]
  %s2 = inlined_call_operand.hbm [shape: f32[8,128], index: 2, kind: input, shape index: {}]
  %s3 = inlined_call_operand.hbm [shape: f32[8,128], index: 3, kind: output, shape index: {0}]
  %s4 = inlined_call_operand.vmem [shape: f32[8,1], index: 4, kind: output, shape index: {1}]
  %s5 = inlined_call_operand.vmem [shape: f32[8,1], index: 5, kind: output, shape index: {2}]
  %6 = xla_tuple %s3, %s4, %s5
  %s7 = sld [smem:[#allocation0]]
  $region50: #{tpu_custom_call.1} parent=0
    _
  %s9 = ssub.s32 1, %s7
  %s10 = scalar_select 0, %s9, %s7
  $region1: #{tpu_custom_call.1} parent=0
    #allocation2 [shape = 'u8[4096]{0}', space=vmem, size = 0x1000, scoped, tag = 'input window, operand 0, single buffered']
    #allocation3 [shape = 's32[1]{0}', space=sflag, size = 0x4, scoped, tag = 'scoped memory for tpu_custom_call.1']
    #allocation4 [shape = 's32[1]{0}', space=sflag, size = 0x4, scoped, tag = 'scoped memory for tpu_custom_call.1']
    #allocation5 [shape = 'u8[8192]{0}', space=vmem, size = 0x2000, scoped, tag = 'input window, operand 1, single buffered']
    #allocation6 [shape = 's32[1]{0}', space=sflag, size = 0x4, scoped, tag = 'scoped memory for tpu_custom_call.1']
    #allocation7 [shape = 'u8[4096]{0}', space=vmem, size = 0x1000, scoped, tag = 'input window, operand 2, single buffered']
    #allocation8 [shape = 'u8[4096]{0}', space=vmem, size = 0x1000, scoped, tag = 'output window, operand 0, single buffered']
    %11 = vsyncpa [#allocation3], 0
    %12 = vsyncpa [#allocation6], 0
    %13 = vsyncpa [#allocation4], 0
    // Predicated region
    $region2: #{tpu_custom_call.1} parent=1 // pred_check
      _
    $region3: #{tpu_custom_call.1} parent=1 // pred_check_branch
      %15 = sbr.rel (0) target = $region5
    $region4: #{tpu_custom_call.1} parent=1 // pred_region
      %s17 = ssub.s32 128, 128
      %18 = vsyncadd [#allocation3], %s17
      %s20 = sshll.u32 [#allocation2], 4
      %s21 = int_to_ptr.vmem [resolvable:$true] %s20
      %23 = dma.hbm_to_vmem [thread:$0]  %s0, 128, %s21, [#allocation3]
    $region5: #{tpu_custom_call.1} parent=1 // pred_fallthru
      _
    // Predicated region
    $region6: #{tpu_custom_call.1} parent=1 // pred_check
      _
    $region7: #{tpu_custom_call.1} parent=1 // pred_check_branch
      %25 = sbr.rel (0) target = $region9
    $region8: #{tpu_custom_call.1} parent=1 // pred_region
      %s27 = ssub.s32 256, 256
      %28 = vsyncadd [#allocation6], %s27
      %s29 = sshll.u32 [#allocation5], 4
      %s30 = int_to_ptr.vmem [resolvable:$true] %s29
      %35 = dma.hbm_to_vmem [thread:$0]  %s1, 256, %s30, [#allocation6], 128, 128, 8
    $region9: #{tpu_custom_call.1} parent=1 // pred_fallthru
      _
    // Predicated region
    $region10: #{tpu_custom_call.1} parent=1 // pred_check
      _
    $region11: #{tpu_custom_call.1} parent=1 // pred_check_branch
      %37 = sbr.rel (0) target = $region13
    $region12: #{tpu_custom_call.1} parent=1 // pred_region
      %s39 = ssub.s32 128, 128
      %40 = vsyncadd [#allocation6], %s39
      %s42 = sshll.u32 [#allocation7], 4
      %s43 = int_to_ptr.vmem [resolvable:$true] %s42
      %45 = dma.hbm_to_vmem [thread:$0]  %s2, 128, %s43, [#allocation6]
    $region13: #{tpu_custom_call.1} parent=1 // pred_fallthru
      _
    // Predicated region
    $region14: #{tpu_custom_call.1} parent=1 // pred_check
      _
    $region15: #{tpu_custom_call.1} parent=1 // pred_check_branch
      %47 = sbr.rel (0) target = $region17
    $region16: #{tpu_custom_call.1} parent=1 // pred_region
      %48 = dma.done [#allocation3], 128
    $region17: #{tpu_custom_call.1} parent=1 // pred_fallthru
      _
    // Predicated region
    $region18: #{tpu_custom_call.1} parent=1 // pred_check
      _
    $region19: #{tpu_custom_call.1} parent=1 // pred_check_branch
      %50 = sbr.rel (0) target = $region21
    $region20: #{tpu_custom_call.1} parent=1 // pred_region
      %51 = dma.done [#allocation6], 256
    $region21: #{tpu_custom_call.1} parent=1 // pred_fallthru
      _
    // Predicated region
    $region22: #{tpu_custom_call.1} parent=1 // pred_check
      _
    $region23: #{tpu_custom_call.1} parent=1 // pred_check_branch
      %53 = sbr.rel (0) target = $region25
    $region24: #{tpu_custom_call.1} parent=1 // pred_region
      %54 = dma.done [#allocation6], 128
    $region25: #{tpu_custom_call.1} parent=1 // pred_fallthru
      _
    %v55 = vld [vmem:[#allocation2] sm:$0xff]
    %v56 = vld [vmem:[#allocation5] sm:$0xff]
    %v57 = vld [vmem:[#allocation5 + $0x8] sm:$0xff]
    %vm58 = vcmask 130048
    %v60 = vsel %vm58, %v55, 0
    %62 = vmatprep.subr.mxu0 0.0
    %63 = vmatpush1.msra.mxu0 %v56
    %64 = vmatprep.subr.mxu0 0.0
    %65 = vmatpush1.msra.mxu0 %v57
    %66 = vmatprep.subr.mxu0 0.0
    %67 = vmatpush1.msra.mxu0 0.0
    %68 = vmatprep.subr.mxu0 0.0
    %69 = vmatpush1.msra.mxu0 0.0
    %70 = vmatprep.subr.mxu0 0.0
    %71 = vmatpush1.msra.mxu0 0.0
    %72 = vmatprep.subr.mxu0 0.0
    %73 = vmatpush1.msra.mxu0 0.0
    %74 = vmatprep.subr.mxu0 0.0
    %75 = vmatpush1.msra.mxu0 0.0
    %76 = vmatprep.subr.mxu0 0.0
    %77 = vmatpush1.msra.mxu0 0.0
    %78 = vmatprep.subr.mxu0 0.0
    %79 = vmatpush1.msra.mxu0 0.0
    %80 = vmatprep.subr.mxu0 0.0
    %81 = vmatpush1.msra.mxu0 0.0
    %82 = vmatprep.subr.mxu0 0.0
    %83 = vmatpush1.msra.mxu0 0.0
    %84 = vmatprep.subr.mxu0 0.0
    %85 = vmatpush1.msra.mxu0 0.0
    %86 = vmatprep.subr.mxu0 0.0
    %87 = vmatpush1.msra.mxu0 0.0
    %88 = vmatprep.subr.mxu0 0.0
    %89 = vmatpush1.msra.mxu0 0.0
    %90 = vmatprep.subr.mxu0 0.0
    %91 = vmatpush1.msra.mxu0 0.0
    %92 = vmatprep.subr.mxu0 0.0
    %93 = vmatpush1.msra.mxu0 0.0
    %94 = vmatprep.subr.mxu0 0.0
    %95 = vmatpush1.msra.mxu0 0.0
    %96 = vmatprep.subr.mxu0 0.0
    %97 = vmatpush1.msra.mxu0 0.0
    %98 = vmatprep.subr.mxu0 0.0
    %99 = vmatpush1.msra.mxu0 0.0
    %100 = vmatprep.subr.mxu0 0.0
    %101 = vmatpush1.msra.mxu0 0.0
    %102 = vmatprep.subr.mxu0 0.0
    %103 = vmatpush1.msra.mxu0 0.0
    %104 = vmatprep.subr.mxu0 0.0
    %105 = vmatpush1.msra.mxu0 0.0
    %106 = vmatprep.subr.mxu0 0.0
    %107 = vmatpush1.msra.mxu0 0.0
    %108 = vmatprep.subr.mxu0 0.0
    %109 = vmatpush1.msra.mxu0 0.0
    %110 = vmatprep.subr.mxu0 0.0
    %111 = vmatpush1.msra.mxu0 0.0
    %112 = vmatprep.subr.mxu0 0.0
    %113 = vmatpush1.msra.mxu0 0.0
    %114 = vmatprep.subr.mxu0 0.0
    %115 = vmatpush1.msra.mxu0 0.0
    %116 = vmatprep.subr.mxu0 0.0
    %117 = vmatpush1.msra.mxu0 0.0
    %118 = vmatprep.subr.mxu0 0.0
    %119 = vmatpush1.msra.mxu0 0.0
    %120 = vmatprep.subr.mxu0 0.0
    %121 = vmatpush1.msra.mxu0 0.0
    %122 = vmatprep.subr.mxu0 0.0
    %123 = vmatpush1.msra.mxu0 0.0
    %124 = vmatprep.subr.mxu0 0.0
    %125 = vmatpush1.msra.mxu0 0.0
    %126 = vmatprep.mubr.f32.mxu0 0.0
    %127 = vmatmul.mubr.f32.gmra.mrb[0].mxu0 %v60
    %v128 = vpop.f32.mrb[0].mxu0
    %v129 = vadd.f32 0.0, %v128
    %v130 = vpop.f32.mrb[0].mxu0
    %131 = vdwg.mxu0
    %132 = vst [vmem:[#allocation8] sm:$0xff] %v129
    %v133 = vld [vmem:[#allocation7] sm:$0x1]
    %v134 = vld [vmem:[#allocation7 + $0x1] sm:$0x1]
    %v135 = vlaneseq
    %v136 = vshrl.u32 %v135, 7
    %v137 = vsub.s32 0, %v136
    %v138 = vrot.slane %v133, %v137
    %v139 = vmul.f32 %v129, %v138
    %140 = vadd.xlane.f32.xlu0 %v139
    %v141 = vpop.xlane.xlu0 %140
    %vm142 = vcmask 7168
    %143 = vst.msk [vmem:[%s4] sm:$0xff] %vm142, %v141
    %v144 = vlaneseq
    %v145 = vshrl.u32 %v144, 7
    %v146 = vsub.s32 0, %v145
    %v147 = vrot.slane %v134, %v146
    %v148 = vmul.f32 %v129, %v147
    %149 = vadd.xlane.f32.xlu0 %v148
    %v150 = vpop.xlane.xlu0 %149
    %151 = vst.msk [vmem:[%s5] sm:$0xff] %vm142, %v150
    // Predicated region
    $region26: #{tpu_custom_call.1} parent=1 // pred_check
      _
    $region27: #{tpu_custom_call.1} parent=1 // pred_check_branch
      %153 = sbr.rel (0) target = $region29
    $region28: #{tpu_custom_call.1} parent=1 // pred_region
      %s155 = ssub.s32 128, 128
      %156 = vsyncadd [#allocation4], %s155
      %s158 = sshll.u32 [#allocation8], 4
      %s159 = int_to_ptr.vmem [resolvable:$true] %s158
      %161 = dma.vmem_to_hbm [thread:$0]  %s159, 128, %s3, [#allocation4]
    $region29: #{tpu_custom_call.1} parent=1 // pred_fallthru
      _
    // Predicated region
    $region30: #{tpu_custom_call.1} parent=1 // pred_check
      _
    $region31: #{tpu_custom_call.1} parent=1 // pred_check_branch
      %163 = sbr.rel (0) target = $region33
    $region32: #{tpu_custom_call.1} parent=1 // pred_region
      _
    $region33: #{tpu_custom_call.1} parent=1 // pred_fallthru
      _
    // Predicated region
    $region34: #{tpu_custom_call.1} parent=1 // pred_check
      _
    $region35: #{tpu_custom_call.1} parent=1 // pred_check_branch
      %165 = sbr.rel (0) target = $region37
    $region36: #{tpu_custom_call.1} parent=1 // pred_region
      _
    $region37: #{tpu_custom_call.1} parent=1 // pred_fallthru
      _
    // Predicated region
    $region38: #{tpu_custom_call.1} parent=1 // pred_check
      _
    $region39: #{tpu_custom_call.1} parent=1 // pred_check_branch
      %167 = sbr.rel (0) target = $region41
    $region40: #{tpu_custom_call.1} parent=1 // pred_region
      %168 = dma.done [#allocation4], 128
    $region41: #{tpu_custom_call.1} parent=1 // pred_fallthru
      _
    // Predicated region
    $region42: #{tpu_custom_call.1} parent=1 // pred_check
      _
    $region43: #{tpu_custom_call.1} parent=1 // pred_check_branch
      %170 = sbr.rel (0) target = $region45
    $region44: #{tpu_custom_call.1} parent=1 // pred_region
      _
    $region45: #{tpu_custom_call.1} parent=1 // pred_fallthru
      _
    // Predicated region
    $region46: #{tpu_custom_call.1} parent=1 // pred_check
      _
    $region47: #{tpu_custom_call.1} parent=1 // pred_check_branch
      %172 = sbr.rel (0) target = $region49
    $region48: #{tpu_custom_call.1} parent=1 // pred_region
      _
    $region49: #{tpu_custom_call.1} parent=1 // pred_fallthru
      _
    %173 = vsyncpa [#allocation3], 1
    %174 = vsyncpa [#allocation6], 1
    %175 = vsyncpa [#allocation4], 1

</llo_original>
